<compile_context>
chip_gen: v7x
topology: tpu7x:2x2x1
jax: 0.10.0
libtpu: 0.0.40
codegen_flags: <defaults>
</compile_context>

<pallas_src>
import math

import jax
import jax.numpy as jnp
import numpy as np
from jax.experimental import pallas as pl
from jax.experimental.pallas import tpu as pltpu


def _embedding_kernel(x_ref, w1_ref, w2_ref, w3_ref, c_ref, o_ref):
    # x_ref : (1, tt, F) time slab of one batch element.
    # w*_ref: channel-major folded weights  W1:(H,F), W2:(H,H), W3:(H,H).
    # c_ref : (H, 3) packed biases, column j = bias of layer j+1.
    # o_ref : (1, H, tt) output slab (already NCHW layout, lane-dense store).
    xt = jnp.transpose(x_ref[0], (1, 0))                                # (F, tt) on XLU
    c1 = c_ref[:, 0:1]                                                  # (H, 1)
    c2 = c_ref[:, 1:2]
    c3 = c_ref[:, 2:3]
    h1 = jnp.dot(w1_ref[...], xt, preferred_element_type=jnp.float32)   # (H, tt)
    r1 = jnp.maximum(h1 + c1, 0.0)                                      # conv1+bn0/bn1 folded
    h2 = jnp.dot(w2_ref[...], r1, preferred_element_type=jnp.float32)
    r2 = jnp.maximum(h2 + c2, 0.0)                                      # conv2+bn2 folded
    h3 = jnp.dot(w3_ref[...], r2, preferred_element_type=jnp.float32)
    r3 = jnp.maximum(h3 + c3, 0.0)                                      # conv3+bn3 folded
    o_ref[0] = r3.astype(o_ref.dtype)                                   # (H, tt) lane-dense


def _fold_bn(w1, w2, w3, bn_params):
    """Fold eval-mode BatchNorm affines (scale, shift) into the 1x1 conv weights.

    Returns channel-major weights W_l = A_l^T and per-layer biases c_l such that
    emb^T = relu(W3 @ relu(W2 @ relu(W1 @ x^T + c1) + c2) + c3).
    """
    (s0, b0), (s1, b1), (s2, b2), (s3, b3) = bn_params
    A1 = (s0[:, None] * w1) * s1[None, :]
    c1 = (b0 @ w1) * s1 + b1
    A2 = w2 * s2[None, :]
    c2 = b2
    A3 = w3 * s3[None, :]
    c3 = b3
    W1, W2, W3 = A1.T, A2.T, A3.T                      # channel-major (out, in)
    c_packed = jnp.stack([c1, c2, c3], axis=1)         # (H, 3)
    return W1, W2, W3, c_packed


def _round_up(v, m):
    return (v + m - 1) // m * m


def embedding_layers_forward(x, w1, w2, w3, bn_params, *, tt=1024):
    """x: (B, T, F) float32. Returns emb with PyTorch layout (B, H, T, 1)."""
    B, T, F = x.shape
    H = w1.shape[1]

    # One-time BN fold + channel-major weight layout (done at init in production).
    W1, W2, W3, c_packed = _fold_bn(w1, w2, w3, bn_params)

    # Time tile: multiple of 128 (lane-dense), capped near T for small T.
    t128 = _round_up(T, 128)
    tt = min(tt, t128)
    if B == 1 and t128 >= 256:
        # v7x has 2 TensorCores: make sure the parallel grid has >= 2 steps.
        tt = min(tt, max(128, (t128 // 2) // 128 * 128))
    T_pad = _round_up(T, tt)
    if T_pad != T:
        x = jnp.pad(x, ((0, 0), (0, T_pad - T), (0, 0)))
    nT = T_pad // tt

    x_spec = pl.BlockSpec((1, tt, F), lambda b, j: (b, j, 0))
    out_spec = pl.BlockSpec((1, H, tt), lambda b, j: (b, 0, j))
    full = lambda shape: pl.BlockSpec(shape, lambda b, j: (0,) * len(shape))

    flops = 2 * B * T_pad * (F * H + 2 * H * H)
    bytes_accessed = 4 * (B * T_pad * (F + H) + F * H + 2 * H * H + 3 * H)

    out = pl.pallas_call(
        _embedding_kernel,
        out_shape=jax.ShapeDtypeStruct((B, H, T_pad), jnp.float32),
        grid_spec=pltpu.PrefetchScalarGridSpec(
            num_scalar_prefetch=0,
            grid=(B, nT),
            in_specs=[
                x_spec,            # x time slab (1, tt, F)
                full((H, F)),      # W1 (bn0/bn1 folded into conv1, transposed)
                full((H, H)),      # W2
                full((H, H)),      # W3
                full((H, 3)),      # packed biases c1|c2|c3
            ],
            out_specs=out_spec,
        ),
        compiler_params=pltpu.CompilerParams(
            dimension_semantics=("parallel", "parallel")),
        cost_estimate=pl.CostEstimate(
            flops=flops, transcendentals=0, bytes_accessed=bytes_accessed),
    )(x, W1, W2, W3, c_packed)

    # Output is already NCHW (B, H, T_pad).  Only slice when padding was added
    # (padded columns hold relu(bias-chain) values, not zeros).
    if T_pad != T:
        out = out[:, :, :T]
    return out[..., None]


def _init_conv_weight(key, n_in, n_out):
    # Mirrors init_layer: uniform(-scale, scale), scale = sqrt(2/n)*sqrt(3),
    # n = n_in * 1 * 1 for a 1x1 conv. Stored as (n_in, n_out) so the math is
    # x @ W (equivalent to PyTorch's (n_out, n_in, 1, 1) conv).
    n = n_in
    scale = math.sqrt(2.0 / n) * math.sqrt(3.0)
    return jax.random.uniform(key, (n_in, n_out), jnp.float32, -scale, scale)


def _bn_affine(gamma, beta, mean, var, eps=1e-5):
    scale = gamma / jnp.sqrt(var + eps)
    shift = beta - mean * scale
    return scale, shift


if __name__ == "__main__":
    # Small shapes consistent with forward(): (batch, time_steps, freq_bins)
    B, T, FREQ, HID = 2, 8, 32, 32
    drop_rate = 0.5  # eval mode -> dropout is identity

    key = jax.random.PRNGKey(0)
    kx, k1, k2, k3, kb = jax.random.split(key, 5)

    x = jax.random.normal(kx, (B, T, FREQ), jnp.float32)

    w1 = _init_conv_weight(k1, FREQ, HID)
    w2 = _init_conv_weight(k2, HID, HID)
    w3 = _init_conv_weight(k3, HID, HID)

    # BatchNorm (eval). init_bn gives gamma=1, beta=0, mean=0, var=1; here we
    # use non-trivial running stats to exercise the BN fold (same eval-mode math).
    def make_bn(c, k):
        km, kv = jax.random.split(k)
        gamma = jnp.ones((c,), jnp.float32)
        beta = jnp.zeros((c,), jnp.float32)
        mean = 0.1 * jax.random.normal(km, (c,), jnp.float32)
        var = 1.0 + 0.1 * jax.random.uniform(kv, (c,), jnp.float32)
        return _bn_affine(gamma, beta, mean, var)

    kb0, kb1, kb2, kb3 = jax.random.split(kb, 4)
    bn_params = (make_bn(FREQ, kb0), make_bn(HID, kb1),
                 make_bn(HID, kb2), make_bn(HID, kb3))

    emb = embedding_layers_forward(x, w1, w2, w3, bn_params)
    emb = jax.block_until_ready(emb)
    assert emb.shape == (B, HID, T, 1), emb.shape

    # Pure-JAX reference of the unfolded math (bn0 -> conv/bn/relu x3).
    (s0, b0), (s1, b1), (s2, b2), (s3, b3) = bn_params
    r = x.reshape(B * T, FREQ) * s0 + b0
    r = jnp.maximum((r @ w1) * s1 + b1, 0.0)
    r = jnp.maximum((r @ w2) * s2 + b2, 0.0)
    r = jnp.maximum((r @ w3) * s3 + b3, 0.0)
    ref = jnp.transpose(r.reshape(B, T, HID), (0, 2, 1))[..., None]
    np.testing.assert_allclose(np.asarray(emb), np.asarray(ref),
                               rtol=1e-5, atol=1e-5)

    print("KERNEL_OK")
</pallas_src>

<mosaic_0001>
module attributes {stable_mosaic.version = 11 : i64} {
  func.func @_embedding_kernel(%arg0: i32, %arg1: i32, %arg2: memref<1x128x32xf32, #tpu.memory_space<vmem>>, %arg3: memref<32x32xf32, #tpu.memory_space<vmem>>, %arg4: memref<32x32xf32, #tpu.memory_space<vmem>>, %arg5: memref<32x32xf32, #tpu.memory_space<vmem>>, %arg6: memref<32x3xf32, #tpu.memory_space<vmem>>, %arg7: memref<1x32x128xf32, #tpu.memory_space<vmem>>) attributes {dimension_semantics = [#tpu.dimension_semantics<parallel>, #tpu.dimension_semantics<parallel>], iteration_bounds = array<i64: 2, 1>, scalar_prefetch = 0 : i64, scratch_operands = 0 : i64, tpu.core_type = #tpu.core_type<tc>, window_params = [{transform_indices = @transform_0, window_bounds = array<i64: 1, 128, 32>}, {pipeline_mode = #tpu.pipeline_mode<synchronous>, transform_indices = @transform_1, window_bounds = array<i64: 32, 32>}, {pipeline_mode = #tpu.pipeline_mode<synchronous>, transform_indices = @transform_2, window_bounds = array<i64: 32, 32>}, {pipeline_mode = #tpu.pipeline_mode<synchronous>, transform_indices = @transform_3, window_bounds = array<i64: 32, 32>}, {pipeline_mode = #tpu.pipeline_mode<synchronous>, transform_indices = @transform_4, window_bounds = array<i64: 32, 3>}, {transform_indices = @transform_5, window_bounds = array<i64: 1, 32, 128>}]} {
    %c0 = arith.constant 0 : index
    %c0_0 = arith.constant 0 : index
    %c0_1 = arith.constant 0 : index
    %0 = vector.load %arg2[%c0, %c0_0, %c0_1] : memref<1x128x32xf32, #tpu.memory_space<vmem>>, vector<1x128x32xf32>
    %1 = vector.shape_cast %0 : vector<1x128x32xf32> to vector<128x32xf32>
    %2 = tpu.transpose %1, [1, 0] : vector<128x32xf32> -> vector<32x128xf32>
    %c0_2 = arith.constant 0 : index
    %c0_3 = arith.constant 0 : index
    %3 = vector.load %arg6[%c0_2, %c0_3] : memref<32x3xf32, #tpu.memory_space<vmem>>, vector<32x1xf32>
    %c0_4 = arith.constant 0 : index
    %c1 = arith.constant 1 : index
    %4 = vector.load %arg6[%c0_4, %c1] : memref<32x3xf32, #tpu.memory_space<vmem>>, vector<32x1xf32>
    %c0_5 = arith.constant 0 : index
    %c2 = arith.constant 2 : index
    %5 = vector.load %arg6[%c0_5, %c2] : memref<32x3xf32, #tpu.memory_space<vmem>>, vector<32x1xf32>
    %c0_6 = arith.constant 0 : index
    %c0_7 = arith.constant 0 : index
    %6 = vector.load %arg3[%c0_6, %c0_7] : memref<32x32xf32, #tpu.memory_space<vmem>>, vector<32x32xf32>
    %cst = arith.constant dense<0.000000e+00> : vector<32x128xf32>
    %7 = tpu.matmul %6, %2, %cst {dimension_numbers = #tpu.dot_dimension_numbers<[1], [0], [0], [1], [0, 0, 1, 1], [], []>} : vector<32x32xf32>, vector<32x128xf32>, vector<32x128xf32> -> vector<32x128xf32>
    %8 = vector.broadcast %3 : vector<32x1xf32> to vector<32x128xf32>
    %9 = arith.addf %7, %8 : vector<32x128xf32>
    %cst_8 = arith.constant 0.000000e+00 : f32
    %10 = vector.broadcast %cst_8 : f32 to vector<32x128xf32>
    %11 = arith.maximumf %9, %10 : vector<32x128xf32>
    %c0_9 = arith.constant 0 : index
    %c0_10 = arith.constant 0 : index
    %12 = vector.load %arg4[%c0_9, %c0_10] : memref<32x32xf32, #tpu.memory_space<vmem>>, vector<32x32xf32>
    %cst_11 = arith.constant dense<0.000000e+00> : vector<32x128xf32>
    %13 = tpu.matmul %12, %11, %cst_11 {dimension_numbers = #tpu.dot_dimension_numbers<[1], [0], [0], [1], [0, 0, 1, 1], [], []>} : vector<32x32xf32>, vector<32x128xf32>, vector<32x128xf32> -> vector<32x128xf32>
    %14 = vector.broadcast %4 : vector<32x1xf32> to vector<32x128xf32>
    %15 = arith.addf %13, %14 : vector<32x128xf32>
    %cst_12 = arith.constant 0.000000e+00 : f32
    %16 = vector.broadcast %cst_12 : f32 to vector<32x128xf32>
    %17 = arith.maximumf %15, %16 : vector<32x128xf32>
    %c0_13 = arith.constant 0 : index
    %c0_14 = arith.constant 0 : index
    %18 = vector.load %arg5[%c0_13, %c0_14] : memref<32x32xf32, #tpu.memory_space<vmem>>, vector<32x32xf32>
    %cst_15 = arith.constant dense<0.000000e+00> : vector<32x128xf32>
    %19 = tpu.matmul %18, %17, %cst_15 {dimension_numbers = #tpu.dot_dimension_numbers<[1], [0], [0], [1], [0, 0, 1, 1], [], []>} : vector<32x32xf32>, vector<32x128xf32>, vector<32x128xf32> -> vector<32x128xf32>
    %20 = vector.broadcast %5 : vector<32x1xf32> to vector<32x128xf32>
    %21 = arith.addf %19, %20 : vector<32x128xf32>
    %cst_16 = arith.constant 0.000000e+00 : f32
    %22 = vector.broadcast %cst_16 : f32 to vector<32x128xf32>
    %23 = arith.maximumf %21, %22 : vector<32x128xf32>
    %c0_17 = arith.constant 0 : index
    %c0_18 = arith.constant 0 : index
    %c0_19 = arith.constant 0 : index
    %24 = vector.load %arg7[%c0_17, %c0_18, %c0_19] : memref<1x32x128xf32, #tpu.memory_space<vmem>>, vector<1x32x128xf32>
    %25 = vector.shape_cast %24 : vector<1x32x128xf32> to vector<32x128xf32>
    %26 = vector.shape_cast %23 : vector<32x128xf32> to vector<1x32x128xf32>
    tpu.vector_store %arg7[%c0_17, %c0_18, %c0_19], %26 {strides = array<i32>} : memref<1x32x128xf32, #tpu.memory_space<vmem>>, vector<1x32x128xf32>,
    return
  }
  func.func @transform_0(%arg0: i32, %arg1: i32) -> (i32, i32, i32) {
    %c0_i32 = arith.constant 0 : i32
    %c0_i32_0 = arith.constant 0 : i32
    return %arg0, %arg1, %c0_i32 : i32, i32, i32
  }
  func.func @transform_1(%arg0: i32, %arg1: i32) -> (i32, i32) {
    %c0_i32 = arith.constant 0 : i32
    %c0_i32_0 = arith.constant 0 : i32
    %c0_i32_1 = arith.constant 0 : i32
    return %c0_i32, %c0_i32_0 : i32, i32
  }
  func.func @transform_2(%arg0: i32, %arg1: i32) -> (i32, i32) {
    %c0_i32 = arith.constant 0 : i32
    %c0_i32_0 = arith.constant 0 : i32
    %c0_i32_1 = arith.constant 0 : i32
    return %c0_i32, %c0_i32_0 : i32, i32
  }
  func.func @transform_3(%arg0: i32, %arg1: i32) -> (i32, i32) {
    %c0_i32 = arith.constant 0 : i32
    %c0_i32_0 = arith.constant 0 : i32
    %c0_i32_1 = arith.constant 0 : i32
    return %c0_i32, %c0_i32_0 : i32, i32
  }
  func.func @transform_4(%arg0: i32, %arg1: i32) -> (i32, i32) {
    %c0_i32 = arith.constant 0 : i32
    %c0_i32_0 = arith.constant 0 : i32
    %c0_i32_1 = arith.constant 0 : i32
    return %c0_i32, %c0_i32_0 : i32, i32
  }
  func.func @transform_5(%arg0: i32, %arg1: i32) -> (i32, i32, i32) {
    %c0_i32 = arith.constant 0 : i32
    %c0_i32_0 = arith.constant 0 : i32
    return %arg0, %c0_i32, %arg1 : i32, i32, i32
  }
}

</mosaic_0001>

<llo_original>
// kernel: tpu_custom_call.1
$region0: #{tpu_custom_call.1}
  #allocation0 [shape = 'u32[]', space=smem, size = 0x4, offset = 0x4, fixed_abs, tag = 'smem constant byte address 0x4 - core index']
  #allocation1 [shape = 'u32[144,128]{1,0:T(1,128)}', space=vmem, size = 0x12000, scoped, tag = 'internal scratch']
  %s0 = inlined_call_operand.vmem [shape: f32[2,128,32], index: 0, kind: input, shape index: {}]
  %s1 = inlined_call_operand.vmem [shape: f32[32,32], index: 1, kind: input, shape index: {}]
  %s2 = inlined_call_operand.vmem [shape: f32[32,32], index: 2, kind: input, shape index: {}]
  %s3 = inlined_call_operand.vmem [shape: f32[32,32], index: 3, kind: input, shape index: {}]
  %s4 = inlined_call_operand.vmem [shape: f32[32,3], index: 4, kind: input, shape index: {}]
  %s5 = inlined_call_operand.hbm [shape: f32[2,32,128], index: 5, kind: output, shape index: {}]
  %s6 = sld [smem:[#allocation0]]
  $region53: #{tpu_custom_call.1} parent=0
    _
  %s8 = ssub.s32 1, %s6
  %s9 = scalar_select 0, %s8, %s6
  $region1: #{tpu_custom_call.1} parent=0
    #allocation2 [shape = 'u8[32768]{0}', space=vmem, size = 0x8000, scoped, tag = 'output window, operand 0']
    #allocation3 [shape = 's32[2]{0}', space=sflag, size = 0x8, scoped, tag = 'scoped memory for tpu_custom_call.1']
    %10 = vsyncpa [#allocation3], 0
    %s11 = scalar_lea.sflag [#allocation3], 1
    %12 = vsyncpa %s11, 0
    loop: start=0, step=1, limit=4
    $region2: #{tpu_custom_call.1} parent=1 // loop_pre_header
      _
    $region3: #{tpu_custom_call.1} parent=1 // loop_header
      %s14 = sphi 0, %s18
      %p15 = scmp.ge.s32.totalorder %s14, 4
      %s21 = sphi 0, %s33
      %s22 = sphi 0, %s29
      %s23 = sphi 0, %s21
      %s24 = sphi 0, %s22
      %s25 = sphi 0, %s23
      %s26 = sphi 0, %s24
      %s38 = sphi 0, %s40
      %s41 = sphi 0, %s38
      %s42 = sphi 0, %s41
      %s58 = sphi 0, %s42
      %s62 = sphi 0, %s62
      %s64 = sphi 0, %s62
      %s65 = sphi 0, %s64
      %s79 = sphi 0, %s65
      %s83 = sphi 0, %s83
      %s85 = sphi 0, %s83
      %s86 = sphi 0, %s85
      %s100 = sphi 0, %s86
      %s104 = sphi 0, %s104
      %s106 = sphi 0, %s104
      %s107 = sphi 0, %s106
      %s121 = sphi 0, %s107
      %s125 = sphi 0, %s125
      %s127 = sphi 0, %s125
      %s128 = sphi 0, %s127
      %s142 = sphi 0, %s128
      %s150 = sphi 0, %s152
      %s153 = sphi 0, %s150
      %s154 = sphi 0, %s153
      %s170 = sphi 0, %s154
    $region4: #{tpu_custom_call.1} parent=1 // loop_header_branch
      %17 = sbr.rel (%p15) target = $region8
    $region5: #{tpu_custom_call.1} parent=1 // loop_body
      %s19 = ssub.s32 %s14, 1
      %s20 = ssub.s32 %s14, 2
      %s27 = sadd.s32 1, %s22
      %p28 = scmp.ge.s32.totalorder %s27, 1
      %s29 = scalar_select %p28, 0, %s27
      %s30 = sadd.s32 1, %s21
      %s31 = scalar_select %p28, %s30, %s21
      %p32 = scmp.ge.s32.totalorder %s31, 2
      %s33 = scalar_select %p32, 0, %s31
      %s34 = ssub.s32 %s21, %s33
      %s35 = ssub.s32 %s22, %s29
      %s36 = sor.u32 %s34, %s35
      %p37 = scmp.eq.s32.totalorder %s36, 0
      %s39 = sadd.s32 %s38, 1
      %s40 = scalar_select %p37, %s38, %s39
      %p43 = pneg %p37
      %p44 = scmp.eq.s32.totalorder %s14, 1
      %p45 = por %p43, %p44
      %p46 = scmp.ne.s32.totalorder %s38, %s41
      %p47 = scmp.eq.s32.totalorder %s14, 0
      %p48 = por %p46, %p47
      %p49 = scmp.ne.s32.totalorder %s38, %s41
      %p50 = scmp.eq.s32.totalorder %s19, 1
      %p51 = por %p49, %p50
      %p52 = scmp.ne.s32.totalorder %s41, %s42
      %p53 = scmp.eq.s32.totalorder %s19, 0
      %p54 = por %p52, %p53
      %p55 = scmp.ne.s32.totalorder %s41, %s42
      %p56 = scmp.eq.s32.totalorder %s20, 1
      %p57 = por %p55, %p56
      %p59 = scmp.ne.s32.totalorder %s42, %s58
      %p60 = scmp.eq.s32.totalorder %s20, 0
      %p61 = por %p59, %p60
      %s63 = sadd.s32 %s62, 1
      %p66 = scmp.eq.s32.totalorder %s14, 1
      %p67 = scmp.ne.s32.totalorder %s62, %s64
      %p68 = scmp.eq.s32.totalorder %s14, 0
      %p69 = por %p67, %p68
      %p70 = scmp.ne.s32.totalorder %s62, %s64
      %p71 = scmp.eq.s32.totalorder %s19, 1
      %p72 = por %p70, %p71
      %p73 = scmp.ne.s32.totalorder %s64, %s65
      %p74 = scmp.eq.s32.totalorder %s19, 0
      %p75 = por %p73, %p74
      %p76 = scmp.ne.s32.totalorder %s64, %s65
      %p77 = scmp.eq.s32.totalorder %s20, 1
      %p78 = por %p76, %p77
      %p80 = scmp.ne.s32.totalorder %s65, %s79
      %p81 = scmp.eq.s32.totalorder %s20, 0
      %p82 = por %p80, %p81
      %s84 = sadd.s32 %s83, 1
      %p87 = scmp.eq.s32.totalorder %s14, 1
      %p88 = scmp.ne.s32.totalorder %s83, %s85
      %p89 = scmp.eq.s32.totalorder %s14, 0
      %p90 = por %p88, %p89
      %p91 = scmp.ne.s32.totalorder %s83, %s85
      %p92 = scmp.eq.s32.totalorder %s19, 1
      %p93 = por %p91, %p92
      %p94 = scmp.ne.s32.totalorder %s85, %s86
      %p95 = scmp.eq.s32.totalorder %s19, 0
      %p96 = por %p94, %p95
      %p97 = scmp.ne.s32.totalorder %s85, %s86
      %p98 = scmp.eq.s32.totalorder %s20, 1
      %p99 = por %p97, %p98
      %p101 = scmp.ne.s32.totalorder %s86, %s100
      %p102 = scmp.eq.s32.totalorder %s20, 0
      %p103 = por %p101, %p102
      %s105 = sadd.s32 %s104, 1
      %p108 = scmp.eq.s32.totalorder %s14, 1
      %p109 = scmp.ne.s32.totalorder %s104, %s106
      %p110 = scmp.eq.s32.totalorder %s14, 0
      %p111 = por %p109, %p110
      %p112 = scmp.ne.s32.totalorder %s104, %s106
      %p113 = scmp.eq.s32.totalorder %s19, 1
      %p114 = por %p112, %p113
      %p115 = scmp.ne.s32.totalorder %s106, %s107
      %p116 = scmp.eq.s32.totalorder %s19, 0
      %p117 = por %p115, %p116
      %p118 = scmp.ne.s32.totalorder %s106, %s107
      %p119 = scmp.eq.s32.totalorder %s20, 1
      %p120 = por %p118, %p119
      %p122 = scmp.ne.s32.totalorder %s107, %s121
      %p123 = scmp.eq.s32.totalorder %s20, 0
      %p124 = por %p122, %p123
      %s126 = sadd.s32 %s125, 1
      %p129 = scmp.eq.s32.totalorder %s14, 1
      %p130 = scmp.ne.s32.totalorder %s125, %s127
      %p131 = scmp.eq.s32.totalorder %s14, 0
      %p132 = por %p130, %p131
      %p133 = scmp.ne.s32.totalorder %s125, %s127
      %p134 = scmp.eq.s32.totalorder %s19, 1
      %p135 = por %p133, %p134
      %p136 = scmp.ne.s32.totalorder %s127, %s128
      %p137 = scmp.eq.s32.totalorder %s19, 0
      %p138 = por %p136, %p137
      %p139 = scmp.ne.s32.totalorder %s127, %s128
      %p140 = scmp.eq.s32.totalorder %s20, 1
      %p141 = por %p139, %p140
      %p143 = scmp.ne.s32.totalorder %s128, %s142
      %p144 = scmp.eq.s32.totalorder %s20, 0
      %p145 = por %p143, %p144
      %s146 = ssub.s32 %s21, %s33
      %s147 = ssub.s32 %s22, %s29
      %s148 = sor.u32 %s146, %s147
      %p149 = scmp.eq.s32.totalorder %s148, 0
      %s151 = sadd.s32 %s150, 1
      %s152 = scalar_select %p149, %s150, %s151
      %p155 = pneg %p149
      %p156 = scmp.eq.s32.totalorder %s14, 1
      %p157 = por %p155, %p156
      %p158 = scmp.ne.s32.totalorder %s150, %s153
      %p159 = scmp.eq.s32.totalorder %s14, 0
      %p160 = por %p158, %p159
      %p161 = scmp.ne.s32.totalorder %s150, %s153
      %p162 = scmp.eq.s32.totalorder %s19, 1
      %p163 = por %p161, %p162
      %p164 = scmp.ne.s32.totalorder %s153, %s154
      %p165 = scmp.eq.s32.totalorder %s19, 0
      %p166 = por %p164, %p165
      %p167 = scmp.ne.s32.totalorder %s153, %s154
      %p168 = scmp.eq.s32.totalorder %s20, 1
      %p169 = por %p167, %p168
      %p171 = scmp.ne.s32.totalorder %s154, %s170
      %p172 = scmp.eq.s32.totalorder %s20, 0
      %p173 = por %p171, %p172
      %p174 = scmp.le.s32.totalorder 1, %s14
      %p175 = scmp.lt.s32.totalorder %s14, 3
      %p176 = pnand %p174, %p175
      %p177 = pneg %p176
      // Predicated region
      $region9: #{tpu_custom_call.1} parent=5 // pred_check
        _
      $region10: #{tpu_custom_call.1} parent=5 // pred_check_branch
        %179 = sbr.rel (%p176) target = $region12
      $region11: #{tpu_custom_call.1} parent=5 // pred_region
        %s180 = ssub.s32 %s14, 1
        // Predicated region
        $region13: #{tpu_custom_call.1} parent=11 // pred_check
          %p181 = pneg %p75
        $region14: #{tpu_custom_call.1} parent=11 // pred_check_branch
          %183 = sbr.rel (%p181) target = $region16
        $region15: #{tpu_custom_call.1} parent=11 // pred_region
          _
        $region16: #{tpu_custom_call.1} parent=11 // pred_fallthru
          _
        // Predicated region
        $region17: #{tpu_custom_call.1} parent=11 // pred_check
          %p184 = pneg %p96
        $region18: #{tpu_custom_call.1} parent=11 // pred_check_branch
          %186 = sbr.rel (%p184) target = $region20
        $region19: #{tpu_custom_call.1} parent=11 // pred_region
          _
        $region20: #{tpu_custom_call.1} parent=11 // pred_fallthru
          _
        // Predicated region
        $region21: #{tpu_custom_call.1} parent=11 // pred_check
          %p187 = pneg %p117
        $region22: #{tpu_custom_call.1} parent=11 // pred_check_branch
          %189 = sbr.rel (%p187) target = $region24
        $region23: #{tpu_custom_call.1} parent=11 // pred_region
          _
        $region24: #{tpu_custom_call.1} parent=11 // pred_fallthru
          _
        // Predicated region
        $region25: #{tpu_custom_call.1} parent=11 // pred_check
          %p190 = pneg %p138
        $region26: #{tpu_custom_call.1} parent=11 // pred_check_branch
          %192 = sbr.rel (%p190) target = $region28
        $region27: #{tpu_custom_call.1} parent=11 // pred_region
          _
        $region28: #{tpu_custom_call.1} parent=11 // pred_fallthru
          _
      $region12: #{tpu_custom_call.1} parent=5 // pred_fallthru
        _
      %p193 = scmp.lt.s32.totalorder %s14, 2
      // Predicated region
      $region29: #{tpu_custom_call.1} parent=5 // pred_check
        %p194 = pneg %p193
      $region30: #{tpu_custom_call.1} parent=5 // pred_check_branch
        %196 = sbr.rel (%p194) target = $region32
      $region31: #{tpu_custom_call.1} parent=5 // pred_region
        // Predicated region
        $region33: #{tpu_custom_call.1} parent=31 // pred_check
          %p197 = pneg %p48
        $region34: #{tpu_custom_call.1} parent=31 // pred_check_branch
          %199 = sbr.rel (%p197) target = $region36
        $region35: #{tpu_custom_call.1} parent=31 // pred_region
          %s200 = smul.u32 16, %s22
          %p201 = scmp.lt.s32.totalorder %s21, 1
          %s202 = scalar_select %p201, %s21, 1
          %p203 = scmp.lt.s32.totalorder %s200, 15
          %s204 = scalar_select %p203, %s200, 15
          %s205 = smul.addr %s202, 16
          %s206 = sadd.s32 %s204, %s205
          %s207 = smul.addr %s206, 8
          %s208 = scalar_lea.vmem %s0, %s207
          %s209 = smul.u32 16, %s22
        $region36: #{tpu_custom_call.1} parent=31 // pred_fallthru
          _
      $region32: #{tpu_custom_call.1} parent=5 // pred_fallthru
        _
      %p210 = scmp.le.s32.totalorder 1, %s14
      %p211 = scmp.lt.s32.totalorder %s14, 3
      %p212 = pnand %p210, %p211
      %p213 = pneg %p212
      // Predicated region
      $region37: #{tpu_custom_call.1} parent=5 // pred_check
        _
      $region38: #{tpu_custom_call.1} parent=5 // pred_check_branch
        %215 = sbr.rel (%p212) target = $region40
      $region39: #{tpu_custom_call.1} parent=5 // pred_region
        %s216 = ssub.s32 %s14, 1
        %s217 = smul.u32 16, %s24
        %p218 = scmp.lt.s32.totalorder %s23, 1
        %s219 = scalar_select %p218, %s23, 1
        %p220 = scmp.lt.s32.totalorder %s217, 15
        %s221 = scalar_select %p220, %s217, 15
        %s222 = smul.addr %s219, 16
        %s223 = sadd.s32 %s221, %s222
        %s224 = smul.addr %s223, 8
        %s225 = scalar_lea.vmem %s0, %s224
        %p226 = pneg %p54
        %p227 = pneg %p51
        %p228 = pneg %p75
        %p229 = pneg %p72
        %p230 = pneg %p96
        %p231 = pneg %p93
        %p232 = pneg %p117
        %p233 = pneg %p114
        %p234 = pneg %p138
        %p235 = pneg %p135
        %p236 = pneg %p166
        %p237 = pneg %p163
        %s238 = sand.u32 %s153, 1
        %s239 = scalar_lea.sflag [#allocation3], %s238
        %s240 = sand.u32 %s153, 1
        %s241 = smul.addr %s240, 32
        %s242 = scalar_lea.vmem [#allocation2], %s241
        %s243 = smul.u32 16, %s24
        %p244 = scmp.lt.s32.totalorder %s23, 1
        %s245 = scalar_select %p244, %s23, 1
        %p246 = scmp.lt.s32.totalorder %s243, 15
        %s247 = scalar_select %p246, %s243, 15
        %s248 = smul.addr %s245, 16
        %s249 = sadd.s32 %s247, %s248
        %s250 = smul.addr %s249, 8
        %s251 = scalar_lea.vmem %s0, %s250
        %s252 = smul.u32 16, %s24
        %v253 = vld [vmem:[%s251] sm:$0xff]
        %v254 = vld [vmem:[%s251 + $0x8] sm:$0xff]
        %v255 = vld [vmem:[%s251 + $0x10] sm:$0xff]
        %v256 = vld [vmem:[%s251 + $0x18] sm:$0xff]
        %v257 = vld [vmem:[%s251 + $0x20] sm:$0xff]
        %v258 = vld [vmem:[%s251 + $0x28] sm:$0xff]
        %v259 = vld [vmem:[%s251 + $0x30] sm:$0xff]
        %v260 = vld [vmem:[%s251 + $0x38] sm:$0xff]
        %v261 = vld [vmem:[%s251 + $0x40] sm:$0xff]
        %v262 = vld [vmem:[%s251 + $0x48] sm:$0xff]
        %v263 = vld [vmem:[%s251 + $0x50] sm:$0xff]
        %v264 = vld [vmem:[%s251 + $0x58] sm:$0xff]
        %v265 = vld [vmem:[%s251 + $0x60] sm:$0xff]
        %v266 = vld [vmem:[%s251 + $0x68] sm:$0xff]
        %v267 = vld [vmem:[%s251 + $0x70] sm:$0xff]
        %v268 = vld [vmem:[%s251 + $0x78] sm:$0xff]
        %v269 = vld [vmem:[%s4] sm:$0xff]
        %v270 = vld [vmem:[%s4 + $0x8] sm:$0xff]
        %v271 = vld [vmem:[%s4 + $0x10] sm:$0xff]
        %v272 = vld [vmem:[%s4 + $0x18] sm:$0xff]
        %v273 = vld [vmem:[%s1] sm:$0xff]
        %v274 = vld [vmem:[%s1 + $0x8] sm:$0xff]
        %v275 = vld [vmem:[%s1 + $0x10] sm:$0xff]
        %v276 = vld [vmem:[%s1 + $0x18] sm:$0xff]
        %278 = vset.pattern.permute.xlu0 0
        %279 = vperm.xlu0 %278, %v269
        %v280 = vpop.permute.xlu0 %279
        %283 = vset.pattern.permute.xlu0 0
        %284 = vperm.xlu0 %283, %v270
        %v285 = vpop.permute.xlu0 %284
        %288 = vset.pattern.permute.xlu0 0
        %289 = vperm.xlu0 %288, %v271
        %v290 = vpop.permute.xlu0 %289
        %293 = vset.pattern.permute.xlu0 0
        %294 = vperm.xlu0 %293, %v272
        %v295 = vpop.permute.xlu0 %294
        %vm297 = vcmask 261120
        %v299 = vsel %vm297, %v273, 0
        %v302 = vsel %vm297, %v274, 0
        %v305 = vsel %vm297, %v275, 0
        %v308 = vsel %vm297, %v276, 0
        %v311 = vsel %vm297, %v253, 0
        %v314 = vsel %vm297, %v254, 0
        %v317 = vsel %vm297, %v255, 0
        %v320 = vsel %vm297, %v256, 0
        %v323 = vsel %vm297, %v257, 0
        %v326 = vsel %vm297, %v258, 0
        %v329 = vsel %vm297, %v259, 0
        %v332 = vsel %vm297, %v260, 0
        %v335 = vsel %vm297, %v261, 0
        %v338 = vsel %vm297, %v262, 0
        %v341 = vsel %vm297, %v263, 0
        %v344 = vsel %vm297, %v264, 0
        %v347 = vsel %vm297, %v265, 0
        %v350 = vsel %vm297, %v266, 0
        %v353 = vsel %vm297, %v267, 0
        %v356 = vsel %vm297, %v268, 0
        %358 = vmatprep.subr.mxu0 0.0
        %359 = vmatpush1.xpose.msra.mxu0 %v311
        %360 = vmatprep.subr.mxu0 0.0
        %361 = vmatpush1.xpose.msra.mxu0 %v314
        %362 = vmatprep.subr.mxu0 0.0
        %363 = vmatpush1.xpose.msra.mxu0 %v317
        %364 = vmatprep.subr.mxu0 0.0
        %365 = vmatpush1.xpose.msra.mxu0 %v320
        %366 = vmatprep.subr.mxu0 0.0
        %367 = vmatpush1.xpose.msra.mxu0 %v323
        %368 = vmatprep.subr.mxu0 0.0
        %369 = vmatpush1.xpose.msra.mxu0 %v326
        %370 = vmatprep.subr.mxu0 0.0
        %371 = vmatpush1.xpose.msra.mxu0 %v329
        %372 = vmatprep.subr.mxu0 0.0
        %373 = vmatpush1.xpose.msra.mxu0 %v332
        %374 = vmatprep.subr.mxu0 0.0
        %375 = vmatpush1.xpose.msra.mxu0 %v335
        %376 = vmatprep.subr.mxu0 0.0
        %377 = vmatpush1.xpose.msra.mxu0 %v338
        %378 = vmatprep.subr.mxu0 0.0
        %379 = vmatpush1.xpose.msra.mxu0 %v341
        %380 = vmatprep.subr.mxu0 0.0
        %381 = vmatpush1.xpose.msra.mxu0 %v344
        %382 = vmatprep.subr.mxu0 0.0
        %383 = vmatpush1.xpose.msra.mxu0 %v347
        %384 = vmatprep.subr.mxu0 0.0
        %385 = vmatpush1.xpose.msra.mxu0 %v350
        %386 = vmatprep.subr.mxu0 0.0
        %387 = vmatpush1.xpose.msra.mxu0 %v353
        %388 = vmatprep.subr.mxu0 0.0
        %389 = vmatpush1.xpose.msra.mxu0 %v356
        %390 = vmatprep.subr.mxu0 0.0
        %391 = vmatpush1.xpose.msra.mxu0 0.0
        %392 = vmatprep.subr.mxu0 0.0
        %393 = vmatpush1.xpose.msra.mxu0 0.0
        %394 = vmatprep.subr.mxu0 0.0
        %395 = vmatpush1.xpose.msra.mxu0 0.0
        %396 = vmatprep.subr.mxu0 0.0
        %397 = vmatpush1.xpose.msra.mxu0 0.0
        %398 = vmatprep.subr.mxu0 0.0
        %399 = vmatpush1.xpose.msra.mxu0 0.0
        %400 = vmatprep.subr.mxu0 0.0
        %401 = vmatpush1.xpose.msra.mxu0 0.0
        %402 = vmatprep.subr.mxu0 0.0
        %403 = vmatpush1.xpose.msra.mxu0 0.0
        %404 = vmatprep.subr.mxu0 0.0
        %405 = vmatpush1.xpose.msra.mxu0 0.0
        %406 = vmatprep.subr.mxu0 0.0
        %407 = vmatpush1.xpose.msra.mxu0 0.0
        %408 = vmatprep.subr.mxu0 0.0
        %409 = vmatpush1.xpose.msra.mxu0 0.0
        %410 = vmatprep.subr.mxu0 0.0
        %411 = vmatpush1.xpose.msra.mxu0 0.0
        %412 = vmatprep.subr.mxu0 0.0
        %413 = vmatpush1.xpose.msra.mxu0 0.0
        %414 = vmatprep.subr.mxu0 0.0
        %415 = vmatpush1.xpose.msra.mxu0 0.0
        %416 = vmatprep.subr.mxu0 0.0
        %417 = vmatpush1.xpose.msra.mxu0 0.0
        %418 = vmatprep.subr.mxu0 0.0
        %419 = vmatpush1.xpose.msra.mxu0 0.0
        %420 = vmatprep.subr.mxu0 0.0
        %421 = vmatpush1.xpose.msra.mxu0 0.0
        %422 = vmatprep.mubr.f32.mxu0 0.0
        %423 = vmatmul.mubr.f32.gmra.mrb[0].mxu0 %v299
        %v424 = vpop.f32.mrb[0].mxu0
        %v425 = vadd.f32 %v280, %v424
        %v426 = vpop.f32.mrb[0].mxu0
        %427 = vmatprep.mubr.f32.mxu0 0.0
        %428 = vmatmul.mubr.f32.gmra.mrb[0].mxu0 %v302
        %v429 = vpop.f32.mrb[0].mxu0
        %v430 = vadd.f32 %v285, %v429
        %v431 = vpop.f32.mrb[0].mxu0
        %432 = vmatprep.mubr.f32.mxu0 0.0
        %433 = vmatmul.mubr.f32.gmra.mrb[0].mxu0 %v305
        %v434 = vpop.f32.mrb[0].mxu0
        %v435 = vadd.f32 %v290, %v434
        %v436 = vpop.f32.mrb[0].mxu0
        %437 = vmatprep.mubr.f32.mxu0 0.0
        %438 = vmatmul.mubr.f32.gmra.mrb[0].mxu0 %v308
        %v439 = vpop.f32.mrb[0].mxu0
        %v440 = vadd.f32 %v295, %v439
        %v441 = vpop.f32.mrb[0].mxu0
        %442 = vdwg.mxu0
        %v443 = vmax.f32 %v425, 0.0
        %v444 = vmax.f32 %v430, 0.0
        %v445 = vmax.f32 %v435, 0.0
        %v446 = vmax.f32 %v440, 0.0
        %v447 = vld [vmem:[%s2] sm:$0xff]
        %v448 = vld [vmem:[%s2 + $0x8] sm:$0xff]
        %v449 = vld [vmem:[%s2 + $0x10] sm:$0xff]
        %v450 = vld [vmem:[%s2 + $0x18] sm:$0xff]
        %451 = vset.pattern.permute.xlu0 1
        %452 = vperm.xlu0 %451, %v269
        %v453 = vpop.permute.xlu0 %452
        %455 = vset.pattern.permute.xlu0 1
        %456 = vperm.xlu0 %455, %v270
        %v457 = vpop.permute.xlu0 %456
        %459 = vset.pattern.permute.xlu0 1
        %460 = vperm.xlu0 %459, %v271
        %v461 = vpop.permute.xlu0 %460
        %463 = vset.pattern.permute.xlu0 1
        %464 = vperm.xlu0 %463, %v272
        %v465 = vpop.permute.xlu0 %464
        %v468 = vsel %vm297, %v447, 0
        %v471 = vsel %vm297, %v448, 0
        %v474 = vsel %vm297, %v449, 0
        %v477 = vsel %vm297, %v450, 0
        %479 = vmatprep.subr.mxu0 0.0
        %480 = vmatpush1.msra.mxu0 %v443
        %481 = vmatprep.subr.mxu0 0.0
        %482 = vmatpush1.msra.mxu0 %v444
        %483 = vmatprep.subr.mxu0 0.0
        %484 = vmatpush1.msra.mxu0 %v445
        %485 = vmatprep.subr.mxu0 0.0
        %486 = vmatpush1.msra.mxu0 %v446
        %487 = vmatprep.subr.mxu0 0.0
        %488 = vmatpush1.msra.mxu0 0.0
        %489 = vmatprep.subr.mxu0 0.0
        %490 = vmatpush1.msra.mxu0 0.0
        %491 = vmatprep.subr.mxu0 0.0
        %492 = vmatpush1.msra.mxu0 0.0
        %493 = vmatprep.subr.mxu0 0.0
        %494 = vmatpush1.msra.mxu0 0.0
        %495 = vmatprep.subr.mxu0 0.0
        %496 = vmatpush1.msra.mxu0 0.0
        %497 = vmatprep.subr.mxu0 0.0
        %498 = vmatpush1.msra.mxu0 0.0
        %499 = vmatprep.subr.mxu0 0.0
        %500 = vmatpush1.msra.mxu0 0.0
        %501 = vmatprep.subr.mxu0 0.0
        %502 = vmatpush1.msra.mxu0 0.0
        %503 = vmatprep.subr.mxu0 0.0
        %504 = vmatpush1.msra.mxu0 0.0
        %505 = vmatprep.subr.mxu0 0.0
        %506 = vmatpush1.msra.mxu0 0.0
        %507 = vmatprep.subr.mxu0 0.0
        %508 = vmatpush1.msra.mxu0 0.0
        %509 = vmatprep.subr.mxu0 0.0
        %510 = vmatpush1.msra.mxu0 0.0
        %511 = vmatprep.subr.mxu0 0.0
        %512 = vmatpush1.msra.mxu0 0.0
        %513 = vmatprep.subr.mxu0 0.0
        %514 = vmatpush1.msra.mxu0 0.0
        %515 = vmatprep.subr.mxu0 0.0
        %516 = vmatpush1.msra.mxu0 0.0
        %517 = vmatprep.subr.mxu0 0.0
        %518 = vmatpush1.msra.mxu0 0.0
        %519 = vmatprep.subr.mxu0 0.0
        %520 = vmatpush1.msra.mxu0 0.0
        %521 = vmatprep.subr.mxu0 0.0
        %522 = vmatpush1.msra.mxu0 0.0
        %523 = vmatprep.subr.mxu0 0.0
        %524 = vmatpush1.msra.mxu0 0.0
        %525 = vmatprep.subr.mxu0 0.0
        %526 = vmatpush1.msra.mxu0 0.0
        %527 = vmatprep.subr.mxu0 0.0
        %528 = vmatpush1.msra.mxu0 0.0
        %529 = vmatprep.subr.mxu0 0.0
        %530 = vmatpush1.msra.mxu0 0.0
        %531 = vmatprep.subr.mxu0 0.0
        %532 = vmatpush1.msra.mxu0 0.0
        %533 = vmatprep.subr.mxu0 0.0
        %534 = vmatpush1.msra.mxu0 0.0
        %535 = vmatprep.subr.mxu0 0.0
        %536 = vmatpush1.msra.mxu0 0.0
        %537 = vmatprep.subr.mxu0 0.0
        %538 = vmatpush1.msra.mxu0 0.0
        %539 = vmatprep.subr.mxu0 0.0
        %540 = vmatpush1.msra.mxu0 0.0
        %541 = vmatprep.subr.mxu0 0.0
        %542 = vmatpush1.msra.mxu0 0.0
        %543 = vmatprep.mubr.f32.mxu0 0.0
        %544 = vmatmul.mubr.f32.gmra.mrb[0].mxu0 %v468
        %v545 = vpop.f32.mrb[0].mxu0
        %v546 = vadd.f32 %v453, %v545
        %v547 = vpop.f32.mrb[0].mxu0
        %548 = vmatprep.mubr.f32.mxu0 0.0
        %549 = vmatmul.mubr.f32.gmra.mrb[0].mxu0 %v471
        %v550 = vpop.f32.mrb[0].mxu0
        %v551 = vadd.f32 %v457, %v550
        %v552 = vpop.f32.mrb[0].mxu0
        %553 = vmatprep.mubr.f32.mxu0 0.0
        %554 = vmatmul.mubr.f32.gmra.mrb[0].mxu0 %v474
        %v555 = vpop.f32.mrb[0].mxu0
        %v556 = vadd.f32 %v461, %v555
        %v557 = vpop.f32.mrb[0].mxu0
        %558 = vmatprep.mubr.f32.mxu0 0.0
        %559 = vmatmul.mubr.f32.gmra.mrb[0].mxu0 %v477
        %v560 = vpop.f32.mrb[0].mxu0
        %v561 = vadd.f32 %v465, %v560
        %v562 = vpop.f32.mrb[0].mxu0
        %563 = vdwg.mxu0
        %v564 = vmax.f32 %v546, 0.0
        %v565 = vmax.f32 %v551, 0.0
        %v566 = vmax.f32 %v556, 0.0
        %v567 = vmax.f32 %v561, 0.0
        %v568 = vld [vmem:[%s3] sm:$0xff]
        %v569 = vld [vmem:[%s3 + $0x8] sm:$0xff]
        %v570 = vld [vmem:[%s3 + $0x10] sm:$0xff]
        %v571 = vld [vmem:[%s3 + $0x18] sm:$0xff]
        %572 = vset.pattern.permute.xlu0 2
        %573 = vperm.xlu0 %572, %v269
        %v574 = vpop.permute.xlu0 %573
        %576 = vset.pattern.permute.xlu0 2
        %577 = vperm.xlu0 %576, %v270
        %v578 = vpop.permute.xlu0 %577
        %580 = vset.pattern.permute.xlu0 2
        %581 = vperm.xlu0 %580, %v271
        %v582 = vpop.permute.xlu0 %581
        %584 = vset.pattern.permute.xlu0 2
        %585 = vperm.xlu0 %584, %v272
        %v586 = vpop.permute.xlu0 %585
        %v589 = vsel %vm297, %v568, 0
        %v592 = vsel %vm297, %v569, 0
        %v595 = vsel %vm297, %v570, 0
        %v598 = vsel %vm297, %v571, 0
        %600 = vmatprep.subr.mxu0 0.0
        %601 = vmatpush1.msra.mxu0 %v564
        %602 = vmatprep.subr.mxu0 0.0
        %603 = vmatpush1.msra.mxu0 %v565
        %604 = vmatprep.subr.mxu0 0.0
        %605 = vmatpush1.msra.mxu0 %v566
        %606 = vmatprep.subr.mxu0 0.0
        %607 = vmatpush1.msra.mxu0 %v567
        %608 = vmatprep.subr.mxu0 0.0
        %609 = vmatpush1.msra.mxu0 0.0
        %610 = vmatprep.subr.mxu0 0.0
        %611 = vmatpush1.msra.mxu0 0.0
        %612 = vmatprep.subr.mxu0 0.0
        %613 = vmatpush1.msra.mxu0 0.0
        %614 = vmatprep.subr.mxu0 0.0
        %615 = vmatpush1.msra.mxu0 0.0
        %616 = vmatprep.subr.mxu0 0.0
        %617 = vmatpush1.msra.mxu0 0.0
        %618 = vmatprep.subr.mxu0 0.0
        %619 = vmatpush1.msra.mxu0 0.0
        %620 = vmatprep.subr.mxu0 0.0
        %621 = vmatpush1.msra.mxu0 0.0
        %622 = vmatprep.subr.mxu0 0.0
        %623 = vmatpush1.msra.mxu0 0.0
        %624 = vmatprep.subr.mxu0 0.0
        %625 = vmatpush1.msra.mxu0 0.0
        %626 = vmatprep.subr.mxu0 0.0
        %627 = vmatpush1.msra.mxu0 0.0
        %628 = vmatprep.subr.mxu0 0.0
        %629 = vmatpush1.msra.mxu0 0.0
        %630 = vmatprep.subr.mxu0 0.0
        %631 = vmatpush1.msra.mxu0 0.0
        %632 = vmatprep.subr.mxu0 0.0
        %633 = vmatpush1.msra.mxu0 0.0
        %634 = vmatprep.subr.mxu0 0.0
        %635 = vmatpush1.msra.mxu0 0.0
        %636 = vmatprep.subr.mxu0 0.0
        %637 = vmatpush1.msra.mxu0 0.0
        %638 = vmatprep.subr.mxu0 0.0
        %639 = vmatpush1.msra.mxu0 0.0
        %640 = vmatprep.subr.mxu0 0.0
        %641 = vmatpush1.msra.mxu0 0.0
        %642 = vmatprep.subr.mxu0 0.0
        %643 = vmatpush1.msra.mxu0 0.0
        %644 = vmatprep.subr.mxu0 0.0
        %645 = vmatpush1.msra.mxu0 0.0
        %646 = vmatprep.subr.mxu0 0.0
        %647 = vmatpush1.msra.mxu0 0.0
        %648 = vmatprep.subr.mxu0 0.0
        %649 = vmatpush1.msra.mxu0 0.0
        %650 = vmatprep.subr.mxu0 0.0
        %651 = vmatpush1.msra.mxu0 0.0
        %652 = vmatprep.subr.mxu0 0.0
        %653 = vmatpush1.msra.mxu0 0.0
        %654 = vmatprep.subr.mxu0 0.0
        %655 = vmatpush1.msra.mxu0 0.0
        %656 = vmatprep.subr.mxu0 0.0
        %657 = vmatpush1.msra.mxu0 0.0
        %658 = vmatprep.subr.mxu0 0.0
        %659 = vmatpush1.msra.mxu0 0.0
        %660 = vmatprep.subr.mxu0 0.0
        %661 = vmatpush1.msra.mxu0 0.0
        %662 = vmatprep.subr.mxu0 0.0
        %663 = vmatpush1.msra.mxu0 0.0
        %664 = vmatprep.mubr.f32.mxu0 0.0
        %665 = vmatmul.mubr.f32.gmra.mrb[0].mxu0 %v589
        %v666 = vpop.f32.mrb[0].mxu0
        %v667 = vadd.f32 %v574, %v666
        %v668 = vpop.f32.mrb[0].mxu0
        %669 = vmatprep.mubr.f32.mxu0 0.0
        %670 = vmatmul.mubr.f32.gmra.mrb[0].mxu0 %v592
        %v671 = vpop.f32.mrb[0].mxu0
        %v672 = vadd.f32 %v578, %v671
        %v673 = vpop.f32.mrb[0].mxu0
        %674 = vmatprep.mubr.f32.mxu0 0.0
        %675 = vmatmul.mubr.f32.gmra.mrb[0].mxu0 %v595
        %v676 = vpop.f32.mrb[0].mxu0
        %v677 = vadd.f32 %v582, %v676
        %v678 = vpop.f32.mrb[0].mxu0
        %679 = vmatprep.mubr.f32.mxu0 0.0
        %680 = vmatmul.mubr.f32.gmra.mrb[0].mxu0 %v598
        %v681 = vpop.f32.mrb[0].mxu0
        %v682 = vadd.f32 %v586, %v681
        %v683 = vpop.f32.mrb[0].mxu0
        %684 = vdwg.mxu0
        %v685 = vmax.f32 %v667, 0.0
        %v686 = vmax.f32 %v672, 0.0
        %v687 = vmax.f32 %v677, 0.0
        %v688 = vmax.f32 %v682, 0.0
        %689 = vst [vmem:[%s242] sm:$0xff] %v685
        %690 = vst [vmem:[%s242 + $0x8] sm:$0xff] %v686
        %691 = vst [vmem:[%s242 + $0x10] sm:$0xff] %v687
        %692 = vst [vmem:[%s242 + $0x18] sm:$0xff] %v688
        %s693 = sand.u32 %s153, 1
        %s694 = scalar_lea.sflag [#allocation3], %s693
        %s695 = sand.u32 %s153, 1
        %s696 = smul.addr %s695, 32
        %s697 = scalar_lea.vmem [#allocation2], %s696
        // Predicated region
        $region41: #{tpu_custom_call.1} parent=39 // pred_check
          %p698 = pneg %p163
        $region42: #{tpu_custom_call.1} parent=39 // pred_check_branch
          %700 = sbr.rel (%p698) target = $region44
        $region43: #{tpu_custom_call.1} parent=39 // pred_region
          %s702 = ssub.s32 512, 512
          %703 = vsyncadd %s694, %s702
          %s704 = smul.addr %s23, 4
          %s705 = sadd.s32 %s24, %s704
          %s706 = smul.addr %s705, 128
          %s707 = scalar_lea.hbm %s5, %s706
          %s708 = sshll.u32 %s697, 4
          %s709 = int_to_ptr.vmem [resolvable:$true] %s708
          %714 = dma.vmem_to_hbm [thread:$0]  %s709, 512, %s707, %s694, 128, 128, 8
        $region44: #{tpu_custom_call.1} parent=39 // pred_fallthru
          _
      $region40: #{tpu_custom_call.1} parent=5 // pred_fallthru
        _
      %p715 = scmp.le.s32.totalorder 2, %s14
      // Predicated region
      $region45: #{tpu_custom_call.1} parent=5 // pred_check
        %p716 = pneg %p715
      $region46: #{tpu_custom_call.1} parent=5 // pred_check_branch
        %718 = sbr.rel (%p716) target = $region48
      $region47: #{tpu_custom_call.1} parent=5 // pred_region
        %s719 = ssub.s32 %s14, 2
        // Predicated region
        $region49: #{tpu_custom_call.1} parent=47 // pred_check
          %p720 = pneg %p169
        $region50: #{tpu_custom_call.1} parent=47 // pred_check_branch
          %722 = sbr.rel (%p720) target = $region52
        $region51: #{tpu_custom_call.1} parent=47 // pred_region
          %s723 = sand.u32 %s154, 1
          %s724 = scalar_lea.sflag [#allocation3], %s723
          %s725 = sand.u32 %s154, 1
          %s726 = smul.addr %s725, 32
          %s727 = scalar_lea.vmem [#allocation2], %s726
          %728 = dma.done %s724, 512
        $region52: #{tpu_custom_call.1} parent=47 // pred_fallthru
          _
      $region48: #{tpu_custom_call.1} parent=5 // pred_fallthru
        _
    $region6: #{tpu_custom_call.1} parent=1 // loop_footer
      %s18 = sadd.s32 1, %s14
    $region7: #{tpu_custom_call.1} parent=1 // loop_footer_branch
      %13 = sbr.rel target = $region3
    $region8: #{tpu_custom_call.1} parent=1 // loop_exit
      _
    %729 = vsyncpa [#allocation3], 1
    %s730 = scalar_lea.sflag [#allocation3], 1
    %731 = vsyncpa %s730, 1

</llo_original>
